<compile_context>
chip_gen: v7x
topology: tpu7x:2x2x1
jax: 0.10.0
libtpu: 0.0.40
codegen_flags: <defaults>
</compile_context>

<pallas_src>
import jax
import jax.numpy as jnp
from jax.experimental import pallas as pl
from jax.experimental.pallas import tpu as pltpu


def _pos_emb_kernel(pos_ref, out_ref):
    # pos_ref: (1, TC)  lane-dense slab of the flattened positional table
    # out_ref: (TB, TC) lane-dense slab of the flattened output
    # Sublane broadcast of one row to TB rows; stays on the vld/VPU path.
    out_ref[...] = jnp.broadcast_to(pos_ref[...], out_ref.shape)


def _row_budget_bytes() -> int:
    """Per-output-tile byte budget, sized per TPU generation."""
    kind = ""
    try:
        kind = jax.devices()[0].device_kind.lower()
    except Exception:  # no device info -> conservative default
        pass
    if "v7" in kind:
        return 12 * 1024 * 1024   # 3.2 TB/s HBM: big tiles hide step overhead
    if "v6" in kind:
        return 10 * 1024 * 1024
    if "v5" in kind:
        return 5 * 1024 * 1024    # 820 GB/s: bigger tiles buy little
    return 4 * 1024 * 1024


def positional_embedding_forward(
    h: jax.Array, pos_emb: jax.Array, *, min_pallas_bytes: int = 1 << 20
) -> jax.Array:
    """Returns pos_emb[:S] broadcast to (B, S, D), matching the torch module."""
    B, S = h.shape[:2]
    L, D = pos_emb.shape
    assert S <= L, "sequence length exceeds max_token_length"

    N = S * D
    dtype = pos_emb.dtype
    itemsize = jnp.dtype(dtype).itemsize
    out_bytes = B * N * itemsize

    # Fast path: for tiny outputs, pallas_call launch/step overhead dominates;
    # let XLA broadcast (and fuse into the consumer).
    if out_bytes < min_pallas_bytes:
        return jnp.broadcast_to(pos_emb[:S][None, :, :], (B, S, D))

    # Lane-dense 2-D view: flatten (S, D) -> (N,).  Pure layout plumbing; the
    # reshape back below is layout-preserving for row-major.
    pos_flat = pos_emb[:S].reshape(1, N)

    # Column tile: whole flattened row if small, else a multiple-of-128 chunk.
    col_budget = 1 * 1024 * 1024  # bytes per (1, TC) input slab
    if N * itemsize <= col_budget:
        tc = N
    else:
        tc = max(128, ((col_budget // itemsize) // 128) * 128)

    # Row (batch) tile: as many rows as fit the generation-specific budget,
    # constrained to a multiple of 8 sublanes or the full batch dim.
    row_budget = _row_budget_bytes()
    rows_fit = max(8, row_budget // (tc * itemsize))
    tb = B if B <= rows_fit else (rows_fit // 8) * 8

    # Megacore (v7x): guarantee >= 2 grid blocks for multi-MiB outputs so both
    # TensorCores (and their DMA paths) get work.  Harmless on 1-TC chips.
    if pl.cdiv(B, tb) == 1 and pl.cdiv(N, tc) == 1 and out_bytes > 4 * 1024 * 1024:
        if B >= 16:
            tb = 8 * pl.cdiv(pl.cdiv(B, 2), 8)       # 8-aligned half of B
        elif N > 128:
            tc = 128 * pl.cdiv(pl.cdiv(N, 2), 128)   # 128-aligned half of N

    # Column axis OUTER, batch axis INNER: the (1, tc) pos slab's block index
    # is constant across the inner loop, so it stays resident in VMEM.
    grid = (pl.cdiv(N, tc), pl.cdiv(B, tb))

    # Cover 2x double-buffered output tiles + 2x input slab + slack; never
    # lower than 32 MiB (safe vs. physical VMEM on v5e/v6e/v7x).
    vmem_limit_bytes = max(
        int(2 * tb * tc * itemsize + 2 * tc * itemsize) + (2 << 20),
        32 << 20,
    )

    out2d = pl.pallas_call(
        _pos_emb_kernel,
        out_shape=jax.ShapeDtypeStruct((B, N), dtype),
        grid_spec=pltpu.PrefetchScalarGridSpec(
            num_scalar_prefetch=0,
            grid=grid,
            in_specs=[
                # (1, TC) slab of the flattened pos table; re-fetched only
                # when the outer column index j changes.
                pl.BlockSpec((1, tc), lambda j, i: (0, j)),
            ],
            out_specs=pl.BlockSpec((tb, tc), lambda j, i: (i, j)),
        ),
        compiler_params=pltpu.CompilerParams(
            dimension_semantics=("parallel", "parallel"),
            vmem_limit_bytes=vmem_limit_bytes,
        ),
        cost_estimate=pl.CostEstimate(
            flops=0,
            transcendentals=0,
            bytes_accessed=out_bytes + N * itemsize,
        ),
    )(pos_flat)

    return out2d.reshape(B, S, D)


if __name__ == "__main__":
    # Small shapes consistent with the module's forward:
    #   dim_model = 32, max_token_length = 16, batch B = 2, seq S = 8
    dim_model = 32
    max_token_length = 16
    B, S = 2, 8

    key = jax.random.PRNGKey(0)
    k_emb, k_h = jax.random.split(key)

    # Deterministic parameter init (torch.rand ~ uniform[0,1))
    pos_emb = jax.random.uniform(
        k_emb, (max_token_length, dim_model), dtype=jnp.float32
    )

    # h: only its leading two dims (B, S) matter; give it a hidden dim too.
    h = jax.random.normal(k_h, (B, S, dim_model), dtype=jnp.float32)

    # Force the Pallas path even at this tiny shape so the kernel is exercised.
    out = positional_embedding_forward(h, pos_emb, min_pallas_bytes=0)
    out = jax.block_until_ready(out)

    # Reference check (pure JAX broadcast of the sliced table).
    ref = jnp.broadcast_to(pos_emb[:S][None, :, :], (B, S, dim_model))
    assert out.shape == (B, S, dim_model)
    assert out.dtype == pos_emb.dtype
    assert jnp.array_equal(out, ref)

    # Default call uses the small-shape fast path; must match too.
    out_fast = jax.block_until_ready(positional_embedding_forward(h, pos_emb))
    assert jnp.array_equal(out_fast, ref)

    print("KERNEL_OK")
</pallas_src>

<mosaic_0001>
module attributes {stable_mosaic.version = 11 : i64} {
  func.func @_pos_emb_kernel(%arg0: i32, %arg1: i32, %arg2: memref<1x256xf32, #tpu.memory_space<vmem>>, %arg3: memref<2x256xf32, #tpu.memory_space<vmem>>) attributes {dimension_semantics = [#tpu.dimension_semantics<parallel>, #tpu.dimension_semantics<parallel>], iteration_bounds = array<i64: 1, 1>, scalar_prefetch = 0 : i64, scratch_operands = 0 : i64, tpu.core_type = #tpu.core_type<tc>, window_params = [{transform_indices = @transform_0, window_bounds = array<i64: 1, 256>}, {transform_indices = @transform_1, window_bounds = array<i64: 2, 256>}]} {
    %c0 = arith.constant 0 : index
    %c0_0 = arith.constant 0 : index
    %0 = vector.load %arg2[%c0, %c0_0] : memref<1x256xf32, #tpu.memory_space<vmem>>, vector<1x256xf32>
    %1 = vector.shape_cast %0 : vector<1x256xf32> to vector<1x256xf32>
    %2 = vector.broadcast %1 : vector<1x256xf32> to vector<2x256xf32>
    %c0_1 = arith.constant 0 : index
    %c0_2 = arith.constant 0 : index
    %3 = vector.load %arg3[%c0_1, %c0_2] : memref<2x256xf32, #tpu.memory_space<vmem>>, vector<2x256xf32>
    tpu.vector_store %arg3[%c0_1, %c0_2], %2 {strides = array<i32>} : memref<2x256xf32, #tpu.memory_space<vmem>>, vector<2x256xf32>,
    return
  }
  func.func @transform_0(%arg0: i32, %arg1: i32) -> (i32, i32) {
    %c0_i32 = arith.constant 0 : i32
    %c0_i32_0 = arith.constant 0 : i32
    return %c0_i32, %arg0 : i32, i32
  }
  func.func @transform_1(%arg0: i32, %arg1: i32) -> (i32, i32) {
    %c0_i32 = arith.constant 0 : i32
    return %arg1, %arg0 : i32, i32
  }
}

</mosaic_0001>

<llo_original>
// kernel: tpu_custom_call.1
$region0: #{tpu_custom_call.1}
  #allocation0 [shape = 'u32[]', space=smem, size = 0x4, offset = 0x4, fixed_abs, tag = 'smem constant byte address 0x4 - core index']
  #allocation1 [shape = 'u32[144,128]{1,0:T(1,128)}', space=vmem, size = 0x12000, scoped, tag = 'internal scratch']
  %s0 = inlined_call_operand.hbm [shape: f32[1,256], index: 0, kind: input, shape index: {}]
  %s1 = inlined_call_operand.hbm [shape: f32[2,256], index: 1, kind: output, shape index: {}]
  %s2 = sld [smem:[#allocation0]]
  $region18: #{tpu_custom_call.1} parent=0
    _
  %s4 = ssub.s32 1, %s2
  %s5 = scalar_select 0, %s4, %s2
  $region1: #{tpu_custom_call.1} parent=0
    #allocation2 [shape = 'u8[1024]{0}', space=vmem, size = 0x400, scoped, tag = 'input window, operand 0, single buffered']
    #allocation3 [shape = 's32[1]{0}', space=sflag, size = 0x4, scoped, tag = 'scoped memory for tpu_custom_call.1']
    #allocation4 [shape = 's32[1]{0}', space=sflag, size = 0x4, scoped, tag = 'scoped memory for tpu_custom_call.1']
    #allocation5 [shape = 'u8[2048]{0}', space=vmem, size = 0x800, scoped, tag = 'output window, operand 0, single buffered']
    %6 = vsyncpa [#allocation3], 0
    %7 = vsyncpa [#allocation4], 0
    // Predicated region
    $region2: #{tpu_custom_call.1} parent=1 // pred_check
      _
    $region3: #{tpu_custom_call.1} parent=1 // pred_check_branch
      %9 = sbr.rel (0) target = $region5
    $region4: #{tpu_custom_call.1} parent=1 // pred_region
      %s11 = ssub.s32 32, 32
      %12 = vsyncadd [#allocation3], %s11
      %s14 = sshll.u32 [#allocation2], 4
      %s15 = int_to_ptr.vmem [resolvable:$true] %s14
      %17 = dma.hbm_to_vmem [thread:$0]  %s0, 32, %s15, [#allocation3]
    $region5: #{tpu_custom_call.1} parent=1 // pred_fallthru
      _
    // Predicated region
    $region6: #{tpu_custom_call.1} parent=1 // pred_check
      _
    $region7: #{tpu_custom_call.1} parent=1 // pred_check_branch
      %19 = sbr.rel (0) target = $region9
    $region8: #{tpu_custom_call.1} parent=1 // pred_region
      %20 = dma.done [#allocation3], 32
    $region9: #{tpu_custom_call.1} parent=1 // pred_fallthru
      _
    %v21 = vld [vmem:[#allocation2] sm:$0x3]
    %v23 = vlaneseq
    %v24 = vshrl.u32 %v23, 7
    %v25 = vsub.s32 0, %v24
    %v26 = vrot.slane %v21, %v25
    %v27 = vlaneseq
    %v28 = vshrl.u32 %v27, 7
    %v29 = vsub.s32 1, %v28
    %v30 = vrot.slane %v21, %v29
    %v31 = vcombine.low %v26, %v30
    %v33 = vunpack.c.l.s4 1983009808
    %v34 = vunpack.c.0.s8 %v33
    %v35 = vlaneseq
    %v36 = vshrl.u32 %v35, 7
    %v37 = vsub.s32 %v34, %v36
    %v38 = vrot.slane %v31, %v37
    %40 = vst [vmem:[#allocation5] sm:$0xf] %v38
    // Predicated region
    $region10: #{tpu_custom_call.1} parent=1 // pred_check
      _
    $region11: #{tpu_custom_call.1} parent=1 // pred_check_branch
      %42 = sbr.rel (0) target = $region13
    $region12: #{tpu_custom_call.1} parent=1 // pred_region
      %s44 = ssub.s32 64, 64
      %45 = vsyncadd [#allocation4], %s44
      %s47 = sshll.u32 [#allocation5], 4
      %s48 = int_to_ptr.vmem [resolvable:$true] %s47
      %50 = dma.vmem_to_hbm [thread:$0]  %s48, 64, %s1, [#allocation4]
    $region13: #{tpu_custom_call.1} parent=1 // pred_fallthru
      _
    // Predicated region
    $region14: #{tpu_custom_call.1} parent=1 // pred_check
      _
    $region15: #{tpu_custom_call.1} parent=1 // pred_check_branch
      %52 = sbr.rel (0) target = $region17
    $region16: #{tpu_custom_call.1} parent=1 // pred_region
      %53 = dma.done [#allocation4], 64
    $region17: #{tpu_custom_call.1} parent=1 // pred_fallthru
      _
    %54 = vsyncpa [#allocation3], 1
    %55 = vsyncpa [#allocation4], 1

</llo_original>
